<compile_context>
chip_gen: v5e
topology: v5e:2x2
jax: 0.10.0
libtpu: 0.0.40
codegen_flags: <defaults>
</compile_context>

<pallas_src>
import functools

import jax
import jax.numpy as jnp
from jax.experimental import pallas as pl
from jax.experimental.pallas import tpu as pltpu

_N_PAD = 128          # lane-dense output width
_BLOCK_B = 256        # batch tile for the large-B path


def prepare_linear_params(weight, bias, n_pad=_N_PAD):
    """One-time (init-time) layout prep.

    weight: (out_features, in_features)  -- nn.Linear convention
    bias:   (out_features,)
    Returns W^T zero-padded to (in_features, n_pad) and bias as a (1, n_pad) row.
    """
    out_f, in_f = weight.shape
    wt_pad = jnp.zeros((in_f, n_pad), weight.dtype).at[:, :out_f].set(weight.T)
    b_pad = jnp.zeros((1, n_pad), bias.dtype).at[0, :out_f].set(bias)
    return wt_pad, b_pad


def _linear_kernel(x_ref, wt_ref, b_ref, o_ref):
    # x_ref: (Bt, K), wt_ref: (K, 128) = padded W^T, b_ref: (1, 128), o_ref: (Bt, 128)
    acc = jnp.dot(x_ref[...], wt_ref[...], preferred_element_type=jnp.float32)
    o_ref[...] = (acc + b_ref[...]).astype(o_ref.dtype)


@functools.partial(jax.jit, static_argnames=("out_features",))
def mock_model_forward(x, wt_pad, b_pad, *, out_features=10):
    """Pallas equivalent of MockModel.forward (nn.Linear(10, 10)).

    x:      (B, 10) float32
    wt_pad: (10, 128) float32  -- from prepare_linear_params
    b_pad:  (1, 128)  float32  -- from prepare_linear_params
    """
    B, K = x.shape
    n_pad = wt_pad.shape[1]

    if B > _BLOCK_B and B % _BLOCK_B == 0:
        # Large batch: tile B, parallel grid so both v7x TensorCores take work.
        y_pad = pl.pallas_call(
            _linear_kernel,
            out_shape=jax.ShapeDtypeStruct((B, n_pad), x.dtype),
            grid=(B // _BLOCK_B,),
            in_specs=[
                pl.BlockSpec((_BLOCK_B, K), lambda i: (i, 0)),
                pl.BlockSpec((K, n_pad), lambda i: (0, 0)),
                pl.BlockSpec((1, n_pad), lambda i: (0, 0)),
            ],
            out_specs=pl.BlockSpec((_BLOCK_B, n_pad), lambda i: (i, 0)),
            compiler_params=pltpu.CompilerParams(
                dimension_semantics=("parallel",)),
        )(x, wt_pad, b_pad)
    else:
        # Small batch: single whole-array VMEM invocation, no grid bookkeeping.
        y_pad = pl.pallas_call(
            _linear_kernel,
            out_shape=jax.ShapeDtypeStruct((B, n_pad), x.dtype),
            in_specs=[
                pl.BlockSpec(memory_space=pltpu.MemorySpace.VMEM),
                pl.BlockSpec(memory_space=pltpu.MemorySpace.VMEM),
                pl.BlockSpec(memory_space=pltpu.MemorySpace.VMEM),
            ],
            out_specs=pl.BlockSpec(memory_space=pltpu.MemorySpace.VMEM),
        )(x, wt_pad, b_pad)

    return y_pad[:, :out_features]


if __name__ == "__main__":
    key = jax.random.PRNGKey(0)
    kx, kw, kb, kx2 = jax.random.split(key, 4)

    B, IN, OUT = 8, 10, 10
    x = jax.random.normal(kx, (B, IN), dtype=jnp.float32)

    # Deterministic params mirroring nn.Linear's uniform(-1/sqrt(in), 1/sqrt(in))
    bound = 1.0 / jnp.sqrt(jnp.float32(IN))
    weight = jax.random.uniform(kw, (OUT, IN), dtype=jnp.float32,
                                minval=-bound, maxval=bound)
    bias = jax.random.uniform(kb, (OUT,), dtype=jnp.float32,
                              minval=-bound, maxval=bound)

    # Init-time layout prep (outside the forward hot path).
    wt_pad, b_pad = prepare_linear_params(weight, bias)

    # --- small-batch path ---
    y = mock_model_forward(x, wt_pad, b_pad, out_features=OUT)
    jax.block_until_ready(y)
    y_ref = x @ weight.T + bias
    assert y.shape == (B, OUT)
    assert jnp.allclose(y, y_ref, atol=1e-5, rtol=1e-5)

    # --- batch-tiled (parallel-grid) path ---
    B_big = 512
    x_big = jax.random.normal(kx2, (B_big, IN), dtype=jnp.float32)
    y_big = mock_model_forward(x_big, wt_pad, b_pad, out_features=OUT)
    jax.block_until_ready(y_big)
    y_big_ref = x_big @ weight.T + bias
    assert y_big.shape == (B_big, OUT)
    assert jnp.allclose(y_big, y_big_ref, atol=1e-5, rtol=1e-5)

    print("KERNEL_OK")
</pallas_src>

<mosaic_0001>
module attributes {stable_mosaic.version = 11 : i64} {
  func.func @_linear_kernel(%arg0: memref<8x10xf32, #tpu.memory_space<vmem>>, %arg1: memref<10x128xf32, #tpu.memory_space<vmem>>, %arg2: memref<1x128xf32, #tpu.memory_space<vmem>>, %arg3: memref<8x128xf32, #tpu.memory_space<vmem>>) attributes {dimension_semantics = [], scalar_prefetch = 0 : i64, scratch_operands = 0 : i64, tpu.core_type = #tpu.core_type<tc>} {
    %c0 = arith.constant 0 : index
    %c0_0 = arith.constant 0 : index
    %0 = vector.load %arg0[%c0, %c0_0] : memref<8x10xf32, #tpu.memory_space<vmem>>, vector<8x10xf32>
    %c0_1 = arith.constant 0 : index
    %c0_2 = arith.constant 0 : index
    %1 = vector.load %arg1[%c0_1, %c0_2] : memref<10x128xf32, #tpu.memory_space<vmem>>, vector<10x128xf32>
    %cst = arith.constant dense<0.000000e+00> : vector<8x128xf32>
    %2 = tpu.matmul %0, %1, %cst {dimension_numbers = #tpu.dot_dimension_numbers<[1], [0], [0], [1], [0, 0, 1, 1], [], []>} : vector<8x10xf32>, vector<10x128xf32>, vector<8x128xf32> -> vector<8x128xf32>
    %c0_3 = arith.constant 0 : index
    %c0_4 = arith.constant 0 : index
    %3 = vector.load %arg2[%c0_3, %c0_4] : memref<1x128xf32, #tpu.memory_space<vmem>>, vector<1x128xf32>
    %4 = vector.broadcast %3 : vector<1x128xf32> to vector<8x128xf32>
    %5 = arith.addf %2, %4 : vector<8x128xf32>
    %c0_5 = arith.constant 0 : index
    %c0_6 = arith.constant 0 : index
    %6 = vector.load %arg3[%c0_5, %c0_6] : memref<8x128xf32, #tpu.memory_space<vmem>>, vector<8x128xf32>
    tpu.vector_store %arg3[%c0_5, %c0_6], %5 {strides = array<i32>} : memref<8x128xf32, #tpu.memory_space<vmem>>, vector<8x128xf32>,
    return
  }
}

</mosaic_0001>

<llo_original>
// kernel: mock_model_forward.1
$region0: #{mock_model_forward.1}
  #allocation0 [shape = 'u32[]', space=smem, size = 0x4, offset = 0x4, fixed_abs, tag = 'smem constant byte address 0x4 - core index']
  #allocation1 [shape = 'u32[72,128]{1,0:T(1,128)}', space=vmem, size = 0x9000, scoped, tag = 'internal scratch']
  %s0 = inlined_call_operand.hbm [shape: f32[8,10], index: 0, kind: input, shape index: {}]
  %s1 = inlined_call_operand.hbm [shape: f32[10,128], index: 1, kind: input, shape index: {}]
  %s2 = inlined_call_operand.vmem [shape: f32[1,128], index: 2, kind: input, shape index: {}]
  %s3 = inlined_call_operand.hbm [shape: f32[8,128], index: 3, kind: output, shape index: {}]
  %s4 = sld [smem:[#allocation0]]
  $region30: #{mock_model_forward.1} parent=0
    _
  %s6 = ssub.s32 1, %s4
  %s7 = scalar_select 0, %s6, %s4
  $region1: #{mock_model_forward.1} parent=0
    #allocation2 [shape = 'u8[4096]{0}', space=vmem, size = 0x1000, scoped, tag = 'input window, operand 0, single buffered']
    #allocation3 [shape = 's32[1]{0}', space=sflag, size = 0x4, scoped, tag = 'scoped memory for mock_model_forward.1']
    #allocation4 [shape = 's32[1]{0}', space=sflag, size = 0x4, scoped, tag = 'scoped memory for mock_model_forward.1']
    #allocation5 [shape = 'u8[8192]{0}', space=vmem, size = 0x2000, scoped, tag = 'input window, operand 1, single buffered']
    #allocation6 [shape = 's32[1]{0}', space=sflag, size = 0x4, scoped, tag = 'scoped memory for mock_model_forward.1']
    #allocation7 [shape = 'u8[4096]{0}', space=vmem, size = 0x1000, scoped, tag = 'output window, operand 0, single buffered']
    %8 = vsyncpa [#allocation3], 0
    %9 = vsyncpa [#allocation6], 0
    %10 = vsyncpa [#allocation4], 0
    // Predicated region
    $region2: #{mock_model_forward.1} parent=1 // pred_check
      _
    $region3: #{mock_model_forward.1} parent=1 // pred_check_branch
      %12 = sbr.rel (0) target = $region5
    $region4: #{mock_model_forward.1} parent=1 // pred_region
      %14 = vsyncadd [#allocation3], 0
      %s16 = sshll.u32 %s0, 4
      %s17 = int_to_ptr.hbm [resolvable:$true] %s16
      %s18 = sshll.u32 [#allocation2], 4
      %s19 = int_to_ptr.vmem [resolvable:$true] %s18
      %21 = dma.hbm_to_vmem [thread:$0]  %s17, 128, %s19, [#allocation3]
    $region5: #{mock_model_forward.1} parent=1 // pred_fallthru
      _
    // Predicated region
    $region6: #{mock_model_forward.1} parent=1 // pred_check
      _
    $region7: #{mock_model_forward.1} parent=1 // pred_check_branch
      %23 = sbr.rel (0) target = $region9
    $region8: #{mock_model_forward.1} parent=1 // pred_region
      %25 = vsyncadd [#allocation6], 0
      %s26 = sshll.u32 %s1, 4
      %s27 = int_to_ptr.hbm [resolvable:$true] %s26
      %s28 = sshll.u32 [#allocation5], 4
      %s29 = int_to_ptr.vmem [resolvable:$true] %s28
      %34 = dma.hbm_to_vmem [thread:$0]  %s27, 256, %s29, [#allocation6], 128, 128, 8
    $region9: #{mock_model_forward.1} parent=1 // pred_fallthru
      _
    // Predicated region
    $region10: #{mock_model_forward.1} parent=1 // pred_check
      _
    $region11: #{mock_model_forward.1} parent=1 // pred_check_branch
      %36 = sbr.rel (0) target = $region13
    $region12: #{mock_model_forward.1} parent=1 // pred_region
      _
    $region13: #{mock_model_forward.1} parent=1 // pred_fallthru
      _
    // Predicated region
    $region14: #{mock_model_forward.1} parent=1 // pred_check
      _
    $region15: #{mock_model_forward.1} parent=1 // pred_check_branch
      %38 = sbr.rel (0) target = $region17
    $region16: #{mock_model_forward.1} parent=1 // pred_region
      %40 = dma.done [#allocation3], 128
    $region17: #{mock_model_forward.1} parent=1 // pred_fallthru
      _
    // Predicated region
    $region18: #{mock_model_forward.1} parent=1 // pred_check
      _
    $region19: #{mock_model_forward.1} parent=1 // pred_check_branch
      %42 = sbr.rel (0) target = $region21
    $region20: #{mock_model_forward.1} parent=1 // pred_region
      %44 = dma.done [#allocation6], 256
    $region21: #{mock_model_forward.1} parent=1 // pred_fallthru
      _
    %v45 = vld [vmem:[#allocation2] sm:$0xff]
    %v46 = vld [vmem:[#allocation5] sm:$0xff]
    %v47 = vld [vmem:[#allocation5 + $0x8] sm:$0x3]
    %v48 = vld [vmem:[%s2] sm:$0x1]
    %v50 = vperm.slane %v48, 0
    %vm52 = vcmask 80896
    %v54 = vsel %vm52, %v45, 0
    %vm56 = vcmask 1041408
    %v58 = vsel %vm56, %v47, 0
    %60 = vmatpush.msra.mxu0 0.0
    %61 = vmatpush.msra.mxu0 0.0
    %62 = vmatpush.msra.mxu0 0.0
    %63 = vmatpush.msra.mxu0 0.0
    %64 = vmatpush.msra.mxu0 0.0
    %65 = vmatpush.msra.mxu0 0.0
    %66 = vmatpush.msra.mxu0 0.0
    %67 = vmatpush.msra.mxu0 0.0
    %68 = vmatpush.msra.mxu0 0.0
    %69 = vmatpush.msra.mxu0 0.0
    %70 = vmatpush.msra.mxu0 0.0
    %71 = vmatpush.msra.mxu0 0.0
    %72 = vmatpush.msra.mxu0 0.0
    %73 = vmatpush.msra.mxu0 0.0
    %74 = vmatpush.msra.mxu0 %v58
    %75 = vmatpush.msra.mxu0 %v46
    %76 = vmatmul.f32.gmra.mxu0 %v54
    %v77 = vpop.f32.mrf.mxu0
    %v78 = vadd.f32 %v50, %v77
    %79 = vdwg.mxu0
    %80 = vst [vmem:[#allocation7] sm:$0xff] %v78
    // Predicated region
    $region22: #{mock_model_forward.1} parent=1 // pred_check
      _
    $region23: #{mock_model_forward.1} parent=1 // pred_check_branch
      %82 = sbr.rel (0) target = $region25
    $region24: #{mock_model_forward.1} parent=1 // pred_region
      %84 = vsyncadd [#allocation4], 0
      %s86 = sshll.u32 [#allocation7], 4
      %s87 = int_to_ptr.vmem [resolvable:$true] %s86
      %s88 = sshll.u32 %s3, 4
      %s89 = int_to_ptr.hbm [resolvable:$true] %s88
      %91 = dma.vmem_to_hbm [thread:$0]  %s87, 128, %s89, [#allocation4]
    $region25: #{mock_model_forward.1} parent=1 // pred_fallthru
      _
    // Predicated region
    $region26: #{mock_model_forward.1} parent=1 // pred_check
      _
    $region27: #{mock_model_forward.1} parent=1 // pred_check_branch
      %93 = sbr.rel (0) target = $region29
    $region28: #{mock_model_forward.1} parent=1 // pred_region
      %95 = dma.done [#allocation4], 128
    $region29: #{mock_model_forward.1} parent=1 // pred_fallthru
      _
    %96 = vsyncpa [#allocation3], 1
    %97 = vsyncpa [#allocation6], 1
    %98 = vsyncpa [#allocation4], 1

</llo_original>
